<compile_context>
chip_gen: v7x
topology: tpu7x:2x2x1
jax: 0.10.0
libtpu: 0.0.40
codegen_flags: <defaults>
</compile_context>

<pallas_src>
import jax
import jax.numpy as jnp
from jax import lax
from jax.experimental import pallas as pl
from jax.experimental.pallas import tpu as pltpu

_LANES = 128
_SUBLANES = 8


def _make_l1_kernel(block_rows, valid_rows, needs_mask):
    def kernel(pred_ref, gt_ref, out_ref):
        # Elementwise |pred - gt| in the input dtype; upcast only for the
        # f32 partial-sum accumulation.
        diff = jnp.abs(pred_ref[...] - gt_ref[...]).astype(jnp.float32)
        if needs_mask:
            # Mask rows beyond the array in the (possibly partial) last block.
            row = (pl.program_id(0) * block_rows
                   + lax.broadcasted_iota(jnp.int32, (block_rows, _LANES), 0))
            diff = jnp.where(row < valid_rows, diff, 0.0)
        # VPU-only reduction of the tile into a single (8,128) vreg slab.
        partial = diff.reshape(block_rows // _SUBLANES, _SUBLANES, _LANES).sum(axis=0)
        out_ref[...] = partial.reshape(1, _SUBLANES, _LANES)
    return kernel


def l1_loss(pred, gt, *, block_rows=1024):
    """Mean absolute error, reduction='mean', returned as a float32 scalar."""
    assert pred.shape == gt.shape, "L1Loss requires matching shapes"
    n_elems = pred.size

    # Keep the tile a sublane multiple.
    block_rows = max(_SUBLANES, (block_rows // _SUBLANES) * _SUBLANES)

    flat_pred = pred.reshape(-1)
    flat_gt = gt.reshape(-1)

    vreg_elems = _SUBLANES * _LANES  # 1024
    padded = pl.cdiv(n_elems, vreg_elems) * vreg_elems
    pad = padded - n_elems
    if pad:
        # TODO(synk): only for non-vreg-aligned element counts (<1024 extra
        # zeros); |0-0|=0 so the sum is unaffected; mean uses true n_elems.
        flat_pred = jnp.pad(flat_pred, (0, pad))
        flat_gt = jnp.pad(flat_gt, (0, pad))

    rows = padded // _LANES          # multiple of 8
    pred2d = flat_pred.reshape(rows, _LANES)
    gt2d = flat_gt.reshape(rows, _LANES)

    block_rows = min(block_rows, rows)
    grid = pl.cdiv(rows, block_rows)
    needs_mask = (rows % block_rows) != 0

    kernel = _make_l1_kernel(block_rows, rows, needs_mask)

    partials = pl.pallas_call(
        kernel,
        out_shape=jax.ShapeDtypeStruct((grid, _SUBLANES, _LANES), jnp.float32),
        grid_spec=pltpu.PrefetchScalarGridSpec(
            num_scalar_prefetch=0,
            grid=(grid,),
            in_specs=[
                pl.BlockSpec((block_rows, _LANES), lambda i: (i, 0)),
                pl.BlockSpec((block_rows, _LANES), lambda i: (i, 0)),
            ],
            out_specs=pl.BlockSpec((1, _SUBLANES, _LANES), lambda i: (i, 0, 0)),
        ),
        compiler_params=pltpu.CompilerParams(
            dimension_semantics=("parallel",)),
    )(pred2d, gt2d)

    # Final (tiny) reduction + mean; .sum() on a scalar is a no-op; .float()->f32
    return (jnp.sum(partials) / jnp.float32(n_elems)).astype(jnp.float32)


if __name__ == "__main__":
    key = jax.random.PRNGKey(0)
    k1, k2 = jax.random.split(key)
    pred = jax.random.normal(k1, (2, 4, 16, 16), dtype=jnp.float32)
    gt = jax.random.normal(k2, (2, 4, 16, 16), dtype=jnp.float32)

    out = jax.jit(l1_loss)(pred, gt)
    jax.block_until_ready(out)

    ref = jnp.mean(jnp.abs(pred - gt)).astype(jnp.float32)
    assert jnp.allclose(out, ref, rtol=1e-5, atol=1e-6), (out, ref)
    print("KERNEL_OK")
</pallas_src>

<mosaic_0001>
module attributes {stable_mosaic.version = 11 : i64} {
  func.func @kernel(%arg0: i32, %arg1: memref<16x128xf32, #tpu.memory_space<vmem>>, %arg2: memref<16x128xf32, #tpu.memory_space<vmem>>, %arg3: memref<1x8x128xf32, #tpu.memory_space<vmem>>) attributes {dimension_semantics = [#tpu.dimension_semantics<parallel>], iteration_bounds = array<i64: 1>, scalar_prefetch = 0 : i64, scratch_operands = 0 : i64, tpu.core_type = #tpu.core_type<tc>, window_params = [{transform_indices = @transform_0, window_bounds = array<i64: 16, 128>}, {transform_indices = @transform_1, window_bounds = array<i64: 16, 128>}, {transform_indices = @transform_2, window_bounds = array<i64: 1, 8, 128>}]} {
    %c0 = arith.constant 0 : index
    %c0_0 = arith.constant 0 : index
    %0 = vector.load %arg1[%c0, %c0_0] : memref<16x128xf32, #tpu.memory_space<vmem>>, vector<16x128xf32>
    %c0_1 = arith.constant 0 : index
    %c0_2 = arith.constant 0 : index
    %1 = vector.load %arg2[%c0_1, %c0_2] : memref<16x128xf32, #tpu.memory_space<vmem>>, vector<16x128xf32>
    %2 = arith.subf %0, %1 : vector<16x128xf32>
    %3 = math.absf %2 : vector<16x128xf32>
    %4 = vector.shape_cast %3 : vector<16x128xf32> to vector<2x8x128xf32>
    %cst = arith.constant dense<0.000000e+00> : vector<8x128xf32>
    %5 = vector.multi_reduction <add>, %4, %cst [0] : vector<2x8x128xf32> to vector<8x128xf32>
    %6 = vector.shape_cast %5 : vector<8x128xf32> to vector<1x8x128xf32>
    %c0_3 = arith.constant 0 : index
    %c0_4 = arith.constant 0 : index
    %c0_5 = arith.constant 0 : index
    %7 = vector.load %arg3[%c0_3, %c0_4, %c0_5] : memref<1x8x128xf32, #tpu.memory_space<vmem>>, vector<1x8x128xf32>
    tpu.vector_store %arg3[%c0_3, %c0_4, %c0_5], %6 {strides = array<i32>} : memref<1x8x128xf32, #tpu.memory_space<vmem>>, vector<1x8x128xf32>,
    return
  }
  func.func @transform_0(%arg0: i32) -> (i32, i32) {
    %c0_i32 = arith.constant 0 : i32
    %c0_i32_0 = arith.constant 0 : i32
    return %arg0, %c0_i32 : i32, i32
  }
  func.func @transform_1(%arg0: i32) -> (i32, i32) {
    %c0_i32 = arith.constant 0 : i32
    %c0_i32_0 = arith.constant 0 : i32
    return %arg0, %c0_i32 : i32, i32
  }
  func.func @transform_2(%arg0: i32) -> (i32, i32, i32) {
    %c0_i32 = arith.constant 0 : i32
    %c0_i32_0 = arith.constant 0 : i32
    %c0_i32_1 = arith.constant 0 : i32
    return %arg0, %c0_i32, %c0_i32_0 : i32, i32, i32
  }
}

</mosaic_0001>

<llo_original>
// kernel: l1_loss.1
$region0: #{l1_loss.1}
  #allocation0 [shape = 'u32[]', space=smem, size = 0x4, offset = 0x4, fixed_abs, tag = 'smem constant byte address 0x4 - core index']
  #allocation1 [shape = 'u32[144,128]{1,0:T(1,128)}', space=vmem, size = 0x12000, scoped, tag = 'internal scratch']
  %s0 = inlined_call_operand.vmem [shape: f32[16,128], index: 0, kind: input, shape index: {}]
  %s1 = inlined_call_operand.vmem [shape: f32[16,128], index: 1, kind: input, shape index: {}]
  %s2 = inlined_call_operand.vmem [shape: f32[1,8,128], index: 2, kind: output, shape index: {}]
  %s3 = sld [smem:[#allocation0]]
  $region18: #{l1_loss.1} parent=0
    _
  %s5 = ssub.s32 1, %s3
  %s6 = scalar_select 0, %s5, %s3
  // Predicated region
  $region2: #{l1_loss.1} parent=0 // pred_check
    _
  $region3: #{l1_loss.1} parent=0 // pred_check_branch
    %8 = sbr.rel (0) target = $region5
  $region4: #{l1_loss.1} parent=0 // pred_region
    _
  $region5: #{l1_loss.1} parent=0 // pred_fallthru
    _
  // Predicated region
  $region6: #{l1_loss.1} parent=0 // pred_check
    _
  $region7: #{l1_loss.1} parent=0 // pred_check_branch
    %10 = sbr.rel (0) target = $region9
  $region8: #{l1_loss.1} parent=0 // pred_region
    _
  $region9: #{l1_loss.1} parent=0 // pred_fallthru
    _
  %v11 = vld [vmem:[%s0] sm:$0xff]
  %v12 = vld [vmem:[%s0 + $0x8] sm:$0xff]
  %v13 = vld [vmem:[%s1] sm:$0xff]
  %v14 = vld [vmem:[%s1 + $0x8] sm:$0xff]
  %v15 = vsub.f32 %v11, %v13
  %v16 = vsub.f32 %v12, %v14
  %v17 = vand.u32 2147483647, %v15
  %v18 = vand.u32 2147483647, %v16
  %v19 = vadd.f32 %v17, %v18
  %20 = vst [vmem:[%s2] sm:$0xff] %v19
  // Predicated region
  $region10: #{l1_loss.1} parent=0 // pred_check
    _
  $region11: #{l1_loss.1} parent=0 // pred_check_branch
    %22 = sbr.rel (0) target = $region13
  $region12: #{l1_loss.1} parent=0 // pred_region
    _
  $region13: #{l1_loss.1} parent=0 // pred_fallthru
    _
  // Predicated region
  $region14: #{l1_loss.1} parent=0 // pred_check
    _
  $region15: #{l1_loss.1} parent=0 // pred_check_branch
    %24 = sbr.rel (0) target = $region17
  $region16: #{l1_loss.1} parent=0 // pred_region
    _
  $region17: #{l1_loss.1} parent=0 // pred_fallthru
    _

</llo_original>
